<compile_context>
chip_gen: v5e
topology: v5e:2x2
jax: 0.10.0
libtpu: 0.0.40
codegen_flags: <defaults>
</compile_context>

<pallas_src>
import functools

import jax
import jax.numpy as jnp
from jax.experimental import pallas as pl
from jax.experimental.pallas import tpu as pltpu


def _scan_attention_kernel(q_ref, c_ref, wq_ref, bq_ref, wk_ref, bk_ref, o_ref,
                           *, smooth, eps):
    # Block shapes: q (TB, QL, D), c (TB, SL, D), wq/wk (D, D) in (in, out)
    # orientation, bq/bk (1, D), out (TB, QL, D).
    TB, QL, D = q_ref.shape
    _, SL, _ = c_ref.shape

    q = q_ref[...]           # native dtype (no blanket f32 upcast before the MXU)
    c = c_ref[...]
    wq = wq_ref[...]
    wk = wk_ref[...]
    bq = bq_ref[...]         # (1, D)
    bk = bk_ref[...]
    in_dt = q.dtype

    # ---- Linear projections, flattened over (TB*L, D) to fill MXU rows -------
    sim_q = jnp.dot(q.reshape(TB * QL, D), wq,
                    preferred_element_type=jnp.float32) + bq      # (TB*QL, D) f32
    sim_k = jnp.dot(c.reshape(TB * SL, D), wk,
                    preferred_element_type=jnp.float32) + bk      # (TB*SL, D) f32
    sim_q = sim_q.astype(in_dt).reshape(TB, QL, D)
    sim_k = sim_k.astype(in_dt).reshape(TB, SL, D)

    # ---- attn directly in (Q, S) orientation: contract D of both operands ----
    # (torch: bmm(sim_k, sim_q^T) -> (S, Q); here we keep its transpose (Q, S))
    attn = jnp.einsum('bqd,bsd->bqs', sim_q, sim_k,
                      preferred_element_type=jnp.float32)         # (TB, QL, SL) f32

    # LeakyReLU(0.1)
    attn = jnp.where(attn >= 0.0, attn, 0.1 * attn)

    # l2norm over the query axis (== dim=2 of torch's (b, s, q) tensor).
    # rsqrt(ssq + eps^2) ~= 1/(sqrt(ssq)+eps); issued on the EUP, multiply not divide.
    ssq = jnp.sum(attn * attn, axis=1, keepdims=True)             # (TB, 1, SL)
    attn = attn * jax.lax.rsqrt(ssq + eps * eps)

    # smooth-scaled softmax over the source axis (last dim -> lane reduction).
    logits = attn * smooth
    m = jnp.max(logits, axis=-1, keepdims=True)
    e = jnp.exp(logits - m)
    denom = jnp.sum(e, axis=-1, keepdims=True)                    # (TB, QL, 1)
    p = e * pl.reciprocal(denom, approx=True)                     # EUP reciprocal

    # weightedContext = attn @ context, then l2norm over D.
    wc = jnp.einsum('bqs,bsd->bqd', p.astype(in_dt), c,
                    preferred_element_type=jnp.float32)           # (TB, QL, D) f32
    wsq = jnp.sum(wc * wc, axis=-1, keepdims=True)
    wc = wc * jax.lax.rsqrt(wsq + eps * eps)

    o_ref[...] = wc.astype(o_ref.dtype)


def _pick_batch_block(B, max_block):
    """Largest divisor of B that is <= max_block, preferring >= 2 grid steps
    (so the batch axis can shard across v7x's 2 TensorCores)."""
    cands = [d for d in range(1, min(B, max_block) + 1) if B % d == 0]
    pref = [d for d in cands if B // d >= 2]
    return max(pref) if pref else max(cands)


def _vmem_limit_bytes(TB, QL, SL, D, dtype):
    ib = jnp.dtype(dtype).itemsize
    io_blocks = (TB * QL * D + TB * SL * D + TB * QL * D) * ib        # q, c, out
    weights = (2 * D * D + 2 * D) * ib                                # Wq, Wk, bq, bk
    scratch = (2 * TB * QL * D + TB * SL * D                          # f32 intermediates
               + 3 * TB * QL * SL + TB * QL * D) * 4
    est = 2 * io_blocks + 2 * weights + scratch                       # double-buffered I/O
    return int(min(max(4 * est, 32 * 1024 * 1024), 100 * 1024 * 1024))


def scan_attention(query, context, wq_t, bq, wk_t, bk, smooth, eps=1e-8,
                   *, batch_block=8, pad_lanes=True):
    """query: (B, QL, D), context: (B, SL, D); wq_t/wk_t are (in, out), biases (1, D)."""
    B, QL, D = query.shape
    _, SL, _ = context.shape
    out_dtype = query.dtype

    # Lane-dense feature dim: zero-pad D to a multiple of 128.  Exact: padded
    # weight rows/cols and input/bias columns are zero, so padded columns of
    # sim_q/sim_k/weightedContext are identically zero and all norms/dots match.
    Dp = D
    if pad_lanes and D % 128 != 0:
        Dp = ((D + 127) // 128) * 128
        pad = Dp - D
        query = jnp.pad(query, ((0, 0), (0, 0), (0, pad)))
        context = jnp.pad(context, ((0, 0), (0, 0), (0, pad)))
        wq_t = jnp.pad(wq_t, ((0, pad), (0, pad)))
        wk_t = jnp.pad(wk_t, ((0, pad), (0, pad)))
        bq = jnp.pad(bq, ((0, 0), (0, pad)))
        bk = jnp.pad(bk, ((0, 0), (0, pad)))

    TB = _pick_batch_block(B, batch_block)
    grid = (B // TB,)

    kernel = functools.partial(_scan_attention_kernel,
                               smooth=float(smooth), eps=float(eps))

    out = pl.pallas_call(
        kernel,
        out_shape=jax.ShapeDtypeStruct((B, QL, Dp), out_dtype),
        grid=grid,
        in_specs=[
            pl.BlockSpec((TB, QL, Dp), lambda b: (b, 0, 0)),   # query block
            pl.BlockSpec((TB, SL, Dp), lambda b: (b, 0, 0)),   # context block
            pl.BlockSpec((Dp, Dp), lambda b: (0, 0)),          # Wq^T (in, out)
            pl.BlockSpec((1, Dp), lambda b: (0, 0)),           # bq
            pl.BlockSpec((Dp, Dp), lambda b: (0, 0)),          # Wk^T (in, out)
            pl.BlockSpec((1, Dp), lambda b: (0, 0)),           # bk
        ],
        out_specs=pl.BlockSpec((TB, QL, Dp), lambda b: (b, 0, 0)),
        compiler_params=pltpu.CompilerParams(
            dimension_semantics=("parallel",),
            vmem_limit_bytes=_vmem_limit_bytes(TB, QL, SL, Dp, query.dtype),
        ),
    )(query, context, wq_t, bq, wk_t, bk)

    if Dp != D:
        out = out[:, :, :D]
    return out


def _reference(query, context, wq_t, bq, wk_t, bk, smooth, eps=1e-8):
    """Pure-JAX reference mirroring the PyTorch forward exactly."""
    sim_k = jnp.einsum('bsd,de->bse', context, wk_t) + bk[0]
    sim_q = jnp.einsum('bqd,de->bqe', query, wq_t) + bq[0]
    attn = jnp.einsum('bsd,bqd->bsq', sim_k, sim_q)
    attn = jnp.where(attn >= 0, attn, 0.1 * attn)
    attn = attn / (jnp.sqrt(jnp.sum(attn ** 2, axis=2, keepdims=True)) + eps)
    attn = jax.nn.softmax(jnp.transpose(attn, (0, 2, 1)) * smooth, axis=2)
    wc = jnp.einsum('bqs,bsd->bqd', attn, context)
    wc = wc / (jnp.sqrt(jnp.sum(wc ** 2, axis=-1, keepdims=True)) + eps)
    return wc


if __name__ == "__main__":
    B, QL, SL, D = 2, 8, 16, 32
    smooth = 9.0

    key = jax.random.PRNGKey(0)
    kq, kc, kwq, kbq, kwk, kbk = jax.random.split(key, 6)

    query = jax.random.normal(kq, (B, QL, D), dtype=jnp.float32)
    context = jax.random.normal(kc, (B, SL, D), dtype=jnp.float32)

    # Deterministic Linear params (nn.Linear(embed_size, embed_size) x2 used in fwd).
    scale = 1.0 / jnp.sqrt(jnp.float32(D))
    wq_t = jax.random.uniform(kwq, (D, D), jnp.float32, -scale, scale)   # (in, out)
    bq = jax.random.uniform(kbq, (1, D), jnp.float32, -scale, scale)
    wk_t = jax.random.uniform(kwk, (D, D), jnp.float32, -scale, scale)
    bk = jax.random.uniform(kbk, (1, D), jnp.float32, -scale, scale)
    # fcv parameters exist in the module but are unused in forward -> not materialized.

    out = scan_attention(query, context, wq_t, bq, wk_t, bk, smooth)
    out = jax.block_until_ready(out)

    ref = _reference(query, context, wq_t, bq, wk_t, bk, smooth)
    assert out.shape == (B, QL, D)
    # Slightly relaxed vs f32 exact: kernel uses rsqrt(x+eps^2) inverse norms and an
    # approx EUP reciprocal for the softmax denominator (whose uniform scale cancels
    # through the final l2norm).
    assert jnp.allclose(out, ref, atol=1e-4, rtol=1e-4), (
        float(jnp.max(jnp.abs(out - ref))))

    print("KERNEL_OK")
</pallas_src>

<mosaic_0001>
module attributes {stable_mosaic.version = 11 : i64} {
  func.func @_scan_attention_kernel(%arg0: i32, %arg1: memref<1x8x128xf32, #tpu.memory_space<vmem>>, %arg2: memref<1x16x128xf32, #tpu.memory_space<vmem>>, %arg3: memref<128x128xf32, #tpu.memory_space<vmem>>, %arg4: memref<1x128xf32, #tpu.memory_space<vmem>>, %arg5: memref<128x128xf32, #tpu.memory_space<vmem>>, %arg6: memref<1x128xf32, #tpu.memory_space<vmem>>, %arg7: memref<1x8x128xf32, #tpu.memory_space<vmem>>) attributes {dimension_semantics = [#tpu.dimension_semantics<parallel>], iteration_bounds = array<i64: 2>, scalar_prefetch = 0 : i64, scratch_operands = 0 : i64, tpu.core_type = #tpu.core_type<tc>, window_params = [{transform_indices = @transform_0, window_bounds = array<i64: 1, 8, 128>}, {transform_indices = @transform_1, window_bounds = array<i64: 1, 16, 128>}, {pipeline_mode = #tpu.pipeline_mode<synchronous>, transform_indices = @transform_2, window_bounds = array<i64: 128, 128>}, {pipeline_mode = #tpu.pipeline_mode<synchronous>, transform_indices = @transform_3, window_bounds = array<i64: 1, 128>}, {pipeline_mode = #tpu.pipeline_mode<synchronous>, transform_indices = @transform_4, window_bounds = array<i64: 128, 128>}, {pipeline_mode = #tpu.pipeline_mode<synchronous>, transform_indices = @transform_5, window_bounds = array<i64: 1, 128>}, {transform_indices = @transform_6, window_bounds = array<i64: 1, 8, 128>}]} {
    %c0 = arith.constant 0 : index
    %c0_0 = arith.constant 0 : index
    %c0_1 = arith.constant 0 : index
    %0 = vector.load %arg1[%c0, %c0_0, %c0_1] : memref<1x8x128xf32, #tpu.memory_space<vmem>>, vector<1x8x128xf32>
    %c0_2 = arith.constant 0 : index
    %c0_3 = arith.constant 0 : index
    %c0_4 = arith.constant 0 : index
    %1 = vector.load %arg2[%c0_2, %c0_3, %c0_4] : memref<1x16x128xf32, #tpu.memory_space<vmem>>, vector<1x16x128xf32>
    %c0_5 = arith.constant 0 : index
    %c0_6 = arith.constant 0 : index
    %2 = vector.load %arg3[%c0_5, %c0_6] : memref<128x128xf32, #tpu.memory_space<vmem>>, vector<128x128xf32>
    %c0_7 = arith.constant 0 : index
    %c0_8 = arith.constant 0 : index
    %3 = vector.load %arg5[%c0_7, %c0_8] : memref<128x128xf32, #tpu.memory_space<vmem>>, vector<128x128xf32>
    %c0_9 = arith.constant 0 : index
    %c0_10 = arith.constant 0 : index
    %4 = vector.load %arg4[%c0_9, %c0_10] : memref<1x128xf32, #tpu.memory_space<vmem>>, vector<1x128xf32>
    %c0_11 = arith.constant 0 : index
    %c0_12 = arith.constant 0 : index
    %5 = vector.load %arg6[%c0_11, %c0_12] : memref<1x128xf32, #tpu.memory_space<vmem>>, vector<1x128xf32>
    %6 = vector.shape_cast %0 : vector<1x8x128xf32> to vector<8x128xf32>
    %cst = arith.constant dense<0.000000e+00> : vector<8x128xf32>
    %7 = tpu.matmul %6, %2, %cst {dimension_numbers = #tpu.dot_dimension_numbers<[1], [0], [0], [1], [0, 0, 1, 1], [], []>} : vector<8x128xf32>, vector<128x128xf32>, vector<8x128xf32> -> vector<8x128xf32>
    %8 = vector.broadcast %4 : vector<1x128xf32> to vector<8x128xf32>
    %9 = arith.addf %7, %8 : vector<8x128xf32>
    %10 = vector.shape_cast %1 : vector<1x16x128xf32> to vector<16x128xf32>
    %cst_13 = arith.constant dense<0.000000e+00> : vector<16x128xf32>
    %11 = tpu.matmul %10, %3, %cst_13 {dimension_numbers = #tpu.dot_dimension_numbers<[1], [0], [0], [1], [0, 0, 1, 1], [], []>} : vector<16x128xf32>, vector<128x128xf32>, vector<16x128xf32> -> vector<16x128xf32>
    %12 = vector.broadcast %5 : vector<1x128xf32> to vector<16x128xf32>
    %13 = arith.addf %11, %12 : vector<16x128xf32>
    %14 = vector.shape_cast %9 : vector<8x128xf32> to vector<1x8x128xf32>
    %15 = vector.shape_cast %13 : vector<16x128xf32> to vector<1x16x128xf32>
    "tpu.trace_start"() <{level = 10 : i32, message = "bqd,bsd->bqs"}> : () -> ()
    %cst_14 = arith.constant dense<0.000000e+00> : vector<1x8x16xf32>
    %16 = tpu.matmul %14, %15, %cst_14 {dimension_numbers = #tpu.dot_dimension_numbers<[2], [2], [1], [1], [0, 0, 0, 1, 1, 1], [0], [0]>} : vector<1x8x128xf32>, vector<1x16x128xf32>, vector<1x8x16xf32> -> vector<1x8x16xf32>
    %cst_15 = arith.constant 0.000000e+00 : f32
    "tpu.trace_stop"() : () -> ()
    %17 = vector.broadcast %cst_15 : f32 to vector<1x8x16xf32>
    %18 = arith.cmpf oge, %16, %17 : vector<1x8x16xf32>
    %cst_16 = arith.constant 1.000000e-01 : f32
    %19 = vector.broadcast %cst_16 : f32 to vector<1x8x16xf32>
    %20 = arith.mulf %19, %16 : vector<1x8x16xf32>
    %21 = arith.select %18, %16, %20 : vector<1x8x16xi1>, vector<1x8x16xf32>
    %22 = arith.mulf %21, %21 : vector<1x8x16xf32>
    %cst_17 = arith.constant dense<0.000000e+00> : vector<1x16xf32>
    %23 = vector.multi_reduction <add>, %22, %cst_17 [1] : vector<1x8x16xf32> to vector<1x16xf32>
    %24 = vector.shape_cast %23 : vector<1x16xf32> to vector<1x1x16xf32>
    %cst_18 = arith.constant 1.000000e-16 : f32
    %25 = vector.broadcast %cst_18 : f32 to vector<1x1x16xf32>
    %26 = arith.addf %24, %25 : vector<1x1x16xf32>
    %27 = math.rsqrt %26 : vector<1x1x16xf32>
    %28 = vector.broadcast %27 : vector<1x1x16xf32> to vector<1x8x16xf32>
    %29 = arith.mulf %21, %28 : vector<1x8x16xf32>
    %cst_19 = arith.constant 9.000000e+00 : f32
    %30 = vector.broadcast %cst_19 : f32 to vector<1x8x16xf32>
    %31 = arith.mulf %29, %30 : vector<1x8x16xf32>
    %cst_20 = arith.constant dense<0xFF800000> : vector<1x8xf32>
    %32 = vector.multi_reduction <maximumf>, %31, %cst_20 [2] : vector<1x8x16xf32> to vector<1x8xf32>
    %33 = vector.shape_cast %32 : vector<1x8xf32> to vector<1x8x1xf32>
    %34 = vector.broadcast %33 : vector<1x8x1xf32> to vector<1x8x16xf32>
    %35 = arith.subf %31, %34 : vector<1x8x16xf32>
    %36 = math.exp %35 : vector<1x8x16xf32>
    %cst_21 = arith.constant dense<0.000000e+00> : vector<1x8xf32>
    %37 = vector.multi_reduction <add>, %36, %cst_21 [2] : vector<1x8x16xf32> to vector<1x8xf32>
    %38 = vector.shape_cast %37 : vector<1x8xf32> to vector<1x8x1xf32>
    %39 = tpu.reciprocal %38 {approx = true} : vector<1x8x1xf32> -> vector<1x8x1xf32>
    %40 = vector.broadcast %39 : vector<1x8x1xf32> to vector<1x8x16xf32>
    %41 = arith.mulf %36, %40 : vector<1x8x16xf32>
    "tpu.trace_start"() <{level = 10 : i32, message = "bqs,bsd->bqd"}> : () -> ()
    %cst_22 = arith.constant dense<0.000000e+00> : vector<1x8x128xf32>
    %42 = tpu.matmul %41, %1, %cst_22 {dimension_numbers = #tpu.dot_dimension_numbers<[2], [1], [1], [2], [0, 0, 0, 1, 1, 2], [0], [0]>} : vector<1x8x16xf32>, vector<1x16x128xf32>, vector<1x8x128xf32> -> vector<1x8x128xf32>
    "tpu.trace_stop"() : () -> ()
    %43 = arith.mulf %42, %42 : vector<1x8x128xf32>
    %cst_23 = arith.constant dense<0.000000e+00> : vector<1x8xf32>
    %44 = vector.multi_reduction <add>, %43, %cst_23 [2] : vector<1x8x128xf32> to vector<1x8xf32>
    %45 = vector.shape_cast %44 : vector<1x8xf32> to vector<1x8x1xf32>
    %cst_24 = arith.constant 1.000000e-16 : f32
    %46 = vector.broadcast %cst_24 : f32 to vector<1x8x1xf32>
    %47 = arith.addf %45, %46 : vector<1x8x1xf32>
    %48 = math.rsqrt %47 : vector<1x8x1xf32>
    %49 = vector.broadcast %48 : vector<1x8x1xf32> to vector<1x8x128xf32>
    %50 = arith.mulf %42, %49 : vector<1x8x128xf32>
    %c0_25 = arith.constant 0 : index
    %c0_26 = arith.constant 0 : index
    %c0_27 = arith.constant 0 : index
    %51 = vector.load %arg7[%c0_25, %c0_26, %c0_27] : memref<1x8x128xf32, #tpu.memory_space<vmem>>, vector<1x8x128xf32>
    tpu.vector_store %arg7[%c0_25, %c0_26, %c0_27], %50 {strides = array<i32>} : memref<1x8x128xf32, #tpu.memory_space<vmem>>, vector<1x8x128xf32>,
    return
  }
  func.func @transform_0(%arg0: i32) -> (i32, i32, i32) {
    %c0_i32 = arith.constant 0 : i32
    %c0_i32_0 = arith.constant 0 : i32
    %c0_i32_1 = arith.constant 0 : i32
    return %arg0, %c0_i32, %c0_i32_0 : i32, i32, i32
  }
  func.func @transform_1(%arg0: i32) -> (i32, i32, i32) {
    %c0_i32 = arith.constant 0 : i32
    %c0_i32_0 = arith.constant 0 : i32
    %c0_i32_1 = arith.constant 0 : i32
    return %arg0, %c0_i32, %c0_i32_0 : i32, i32, i32
  }
  func.func @transform_2(%arg0: i32) -> (i32, i32) {
    %c0_i32 = arith.constant 0 : i32
    %c0_i32_0 = arith.constant 0 : i32
    %c0_i32_1 = arith.constant 0 : i32
    return %c0_i32, %c0_i32_0 : i32, i32
  }
  func.func @transform_3(%arg0: i32) -> (i32, i32) {
    %c0_i32 = arith.constant 0 : i32
    %c0_i32_0 = arith.constant 0 : i32
    %c0_i32_1 = arith.constant 0 : i32
    return %c0_i32, %c0_i32_0 : i32, i32
  }
  func.func @transform_4(%arg0: i32) -> (i32, i32) {
    %c0_i32 = arith.constant 0 : i32
    %c0_i32_0 = arith.constant 0 : i32
    %c0_i32_1 = arith.constant 0 : i32
    return %c0_i32, %c0_i32_0 : i32, i32
  }
  func.func @transform_5(%arg0: i32) -> (i32, i32) {
    %c0_i32 = arith.constant 0 : i32
    %c0_i32_0 = arith.constant 0 : i32
    %c0_i32_1 = arith.constant 0 : i32
    return %c0_i32, %c0_i32_0 : i32, i32
  }
  func.func @transform_6(%arg0: i32) -> (i32, i32, i32) {
    %c0_i32 = arith.constant 0 : i32
    %c0_i32_0 = arith.constant 0 : i32
    %c0_i32_1 = arith.constant 0 : i32
    return %arg0, %c0_i32, %c0_i32_0 : i32, i32, i32
  }
}

</mosaic_0001>

<llo_original>
// kernel: tpu_custom_call.1
$region0: #{tpu_custom_call.1}
  #allocation0 [shape = 'u32[]', space=smem, size = 0x4, offset = 0x4, fixed_abs, tag = 'smem constant byte address 0x4 - core index']
  #allocation1 [shape = 'u32[72,128]{1,0:T(1,128)}', space=vmem, size = 0x9000, scoped, tag = 'internal scratch']
  %s0 = inlined_call_operand.hbm [shape: f32[2,8,128], index: 0, kind: input, shape index: {}]
  %s1 = inlined_call_operand.hbm [shape: f32[2,16,128], index: 1, kind: input, shape index: {}]
  %s2 = inlined_call_operand.hbm [shape: f32[128,128], index: 2, kind: input, shape index: {}]
  %s3 = inlined_call_operand.vmem [shape: f32[1,128], index: 3, kind: input, shape index: {}]
  %s4 = inlined_call_operand.hbm [shape: f32[128,128], index: 4, kind: input, shape index: {}]
  %s5 = inlined_call_operand.vmem [shape: f32[1,128], index: 5, kind: input, shape index: {}]
  %s6 = inlined_call_operand.hbm [shape: f32[2,8,128], index: 6, kind: output, shape index: {}]
  %s7 = sld [smem:[#allocation0]]
  $region73: #{tpu_custom_call.1} parent=0
    _
  %s9 = ssub.s32 1, %s7
  %s10 = scalar_select 0, %s9, %s7
  $region1: #{tpu_custom_call.1} parent=0
    #allocation2 [shape = 'u8[8192]{0}', space=vmem, size = 0x2000, scoped, tag = 'input window, operand 0']
    #allocation3 [shape = 's32[2]{0}', space=sflag, size = 0x8, scoped, tag = 'scoped memory for tpu_custom_call.1']
    #allocation4 [shape = 's32[2]{0}', space=sflag, size = 0x8, scoped, tag = 'scoped memory for tpu_custom_call.1']
    #allocation5 [shape = 'u8[16384]{0}', space=vmem, size = 0x4000, scoped, tag = 'input window, operand 1']
    #allocation6 [shape = 's32[2]{0}', space=sflag, size = 0x8, scoped, tag = 'scoped memory for tpu_custom_call.1']
    #allocation7 [shape = 'u8[65536]{0}', space=vmem, size = 0x10000, scoped, tag = 'input window, operand 2, single buffered']
    #allocation8 [shape = 'u8[65536]{0}', space=vmem, size = 0x10000, scoped, tag = 'input window, operand 4, single buffered']
    #allocation9 [shape = 's32[1]{0}', space=sflag, size = 0x4, scoped, tag = 'scoped memory for tpu_custom_call.1']
    #allocation10 [shape = 'u8[8192]{0}', space=vmem, size = 0x2000, scoped, tag = 'output window, operand 0']
    %11 = vsyncpa [#allocation3], 0
    %s12 = scalar_lea.sflag [#allocation3], 1
    %13 = vsyncpa %s12, 0
    %14 = vsyncpa [#allocation6], 0
    %s15 = scalar_lea.sflag [#allocation6], 1
    %16 = vsyncpa %s15, 0
    %17 = vsyncpa [#allocation9], 0
    %18 = vsyncpa [#allocation4], 0
    %s19 = scalar_lea.sflag [#allocation4], 1
    %20 = vsyncpa %s19, 0
    loop: start=0, step=1, limit=4
    $region2: #{tpu_custom_call.1} parent=1 // loop_pre_header
      _
    $region3: #{tpu_custom_call.1} parent=1 // loop_header
      %s22 = sphi 0, %s26
      %p23 = scmp.ge.s32.totalorder %s22, 4
      %s32 = sphi 0, %s34
      %s35 = sphi 0, %s32
      %s36 = sphi 0, %s35
      %s52 = sphi 0, %s36
      %s58 = sphi 0, %s60
      %s61 = sphi 0, %s58
      %s62 = sphi 0, %s61
      %s78 = sphi 0, %s62
      %s82 = sphi 0, %s82
      %s84 = sphi 0, %s82
      %s85 = sphi 0, %s84
      %s99 = sphi 0, %s85
      %s103 = sphi 0, %s103
      %s105 = sphi 0, %s103
      %s106 = sphi 0, %s105
      %s120 = sphi 0, %s106
      %s124 = sphi 0, %s124
      %s126 = sphi 0, %s124
      %s127 = sphi 0, %s126
      %s141 = sphi 0, %s127
      %s145 = sphi 0, %s145
      %s147 = sphi 0, %s145
      %s148 = sphi 0, %s147
      %s162 = sphi 0, %s148
      %s168 = sphi 0, %s170
      %s171 = sphi 0, %s168
      %s172 = sphi 0, %s171
      %s188 = sphi 0, %s172
    $region4: #{tpu_custom_call.1} parent=1 // loop_header_branch
      %25 = sbr.rel (%p23) target = $region8
    $region5: #{tpu_custom_call.1} parent=1 // loop_body
      %s27 = ssub.s32 %s22, 1
      %s28 = ssub.s32 %s22, 2
      %s29 = sadd.s32 %s22, 1
      %s30 = ssub.s32 %s22, %s29
      %p31 = scmp.eq.s32.totalorder %s30, 0
      %s33 = sadd.s32 %s32, 1
      %s34 = scalar_select %p31, %s32, %s33
      %p37 = pneg %p31
      %p38 = scmp.eq.s32.totalorder %s22, 1
      %p39 = por %p37, %p38
      %p40 = scmp.ne.s32.totalorder %s32, %s35
      %p41 = scmp.eq.s32.totalorder %s22, 0
      %p42 = por %p40, %p41
      %p43 = scmp.ne.s32.totalorder %s32, %s35
      %p44 = scmp.eq.s32.totalorder %s27, 1
      %p45 = por %p43, %p44
      %p46 = scmp.ne.s32.totalorder %s35, %s36
      %p47 = scmp.eq.s32.totalorder %s27, 0
      %p48 = por %p46, %p47
      %p49 = scmp.ne.s32.totalorder %s35, %s36
      %p50 = scmp.eq.s32.totalorder %s28, 1
      %p51 = por %p49, %p50
      %p53 = scmp.ne.s32.totalorder %s36, %s52
      %p54 = scmp.eq.s32.totalorder %s28, 0
      %p55 = por %p53, %p54
      %s56 = ssub.s32 %s22, %s29
      %p57 = scmp.eq.s32.totalorder %s56, 0
      %s59 = sadd.s32 %s58, 1
      %s60 = scalar_select %p57, %s58, %s59
      %p63 = pneg %p57
      %p64 = scmp.eq.s32.totalorder %s22, 1
      %p65 = por %p63, %p64
      %p66 = scmp.ne.s32.totalorder %s58, %s61
      %p67 = scmp.eq.s32.totalorder %s22, 0
      %p68 = por %p66, %p67
      %p69 = scmp.ne.s32.totalorder %s58, %s61
      %p70 = scmp.eq.s32.totalorder %s27, 1
      %p71 = por %p69, %p70
      %p72 = scmp.ne.s32.totalorder %s61, %s62
      %p73 = scmp.eq.s32.totalorder %s27, 0
      %p74 = por %p72, %p73
      %p75 = scmp.ne.s32.totalorder %s61, %s62
      %p76 = scmp.eq.s32.totalorder %s28, 1
      %p77 = por %p75, %p76
      %p79 = scmp.ne.s32.totalorder %s62, %s78
      %p80 = scmp.eq.s32.totalorder %s28, 0
      %p81 = por %p79, %p80
      %s83 = sadd.s32 %s82, 1
      %p86 = scmp.eq.s32.totalorder %s22, 1
      %p87 = scmp.ne.s32.totalorder %s82, %s84
      %p88 = scmp.eq.s32.totalorder %s22, 0
      %p89 = por %p87, %p88
      %p90 = scmp.ne.s32.totalorder %s82, %s84
      %p91 = scmp.eq.s32.totalorder %s27, 1
      %p92 = por %p90, %p91
      %p93 = scmp.ne.s32.totalorder %s84, %s85
      %p94 = scmp.eq.s32.totalorder %s27, 0
      %p95 = por %p93, %p94
      %p96 = scmp.ne.s32.totalorder %s84, %s85
      %p97 = scmp.eq.s32.totalorder %s28, 1
      %p98 = por %p96, %p97
      %p100 = scmp.ne.s32.totalorder %s85, %s99
      %p101 = scmp.eq.s32.totalorder %s28, 0
      %p102 = por %p100, %p101
      %s104 = sadd.s32 %s103, 1
      %p107 = scmp.eq.s32.totalorder %s22, 1
      %p108 = scmp.ne.s32.totalorder %s103, %s105
      %p109 = scmp.eq.s32.totalorder %s22, 0
      %p110 = por %p108, %p109
      %p111 = scmp.ne.s32.totalorder %s103, %s105
      %p112 = scmp.eq.s32.totalorder %s27, 1
      %p113 = por %p111, %p112
      %p114 = scmp.ne.s32.totalorder %s105, %s106
      %p115 = scmp.eq.s32.totalorder %s27, 0
      %p116 = por %p114, %p115
      %p117 = scmp.ne.s32.totalorder %s105, %s106
      %p118 = scmp.eq.s32.totalorder %s28, 1
      %p119 = por %p117, %p118
      %p121 = scmp.ne.s32.totalorder %s106, %s120
      %p122 = scmp.eq.s32.totalorder %s28, 0
      %p123 = por %p121, %p122
      %s125 = sadd.s32 %s124, 1
      %p128 = scmp.eq.s32.totalorder %s22, 1
      %p129 = scmp.ne.s32.totalorder %s124, %s126
      %p130 = scmp.eq.s32.totalorder %s22, 0
      %p131 = por %p129, %p130
      %p132 = scmp.ne.s32.totalorder %s124, %s126
      %p133 = scmp.eq.s32.totalorder %s27, 1
      %p134 = por %p132, %p133
      %p135 = scmp.ne.s32.totalorder %s126, %s127
      %p136 = scmp.eq.s32.totalorder %s27, 0
      %p137 = por %p135, %p136
      %p138 = scmp.ne.s32.totalorder %s126, %s127
      %p139 = scmp.eq.s32.totalorder %s28, 1
      %p140 = por %p138, %p139
      %p142 = scmp.ne.s32.totalorder %s127, %s141
      %p143 = scmp.eq.s32.totalorder %s28, 0
      %p144 = por %p142, %p143
      %s146 = sadd.s32 %s145, 1
      %p149 = scmp.eq.s32.totalorder %s22, 1
      %p150 = scmp.ne.s32.totalorder %s145, %s147
      %p151 = scmp.eq.s32.totalorder %s22, 0
      %p152 = por %p150, %p151
      %p153 = scmp.ne.s32.totalorder %s145, %s147
      %p154 = scmp.eq.s32.totalorder %s27, 1
      %p155 = por %p153, %p154
      %p156 = scmp.ne.s32.totalorder %s147, %s148
      %p157 = scmp.eq.s32.totalorder %s27, 0
      %p158 = por %p156, %p157
      %p159 = scmp.ne.s32.totalorder %s147, %s148
      %p160 = scmp.eq.s32.totalorder %s28, 1
      %p161 = por %p159, %p160
      %p163 = scmp.ne.s32.totalorder %s148, %s162
      %p164 = scmp.eq.s32.totalorder %s28, 0
      %p165 = por %p163, %p164
      %s166 = ssub.s32 %s22, %s29
      %p167 = scmp.eq.s32.totalorder %s166, 0
      %s169 = sadd.s32 %s168, 1
      %s170 = scalar_select %p167, %s168, %s169
      %p173 = pneg %p167
      %p174 = scmp.eq.s32.totalorder %s22, 1
      %p175 = por %p173, %p174
      %p176 = scmp.ne.s32.totalorder %s168, %s171
      %p177 = scmp.eq.s32.totalorder %s22, 0
      %p178 = por %p176, %p177
      %p179 = scmp.ne.s32.totalorder %s168, %s171
      %p180 = scmp.eq.s32.totalorder %s27, 1
      %p181 = por %p179, %p180
      %p182 = scmp.ne.s32.totalorder %s171, %s172
      %p183 = scmp.eq.s32.totalorder %s27, 0
      %p184 = por %p182, %p183
      %p185 = scmp.ne.s32.totalorder %s171, %s172
      %p186 = scmp.eq.s32.totalorder %s28, 1
      %p187 = por %p185, %p186
      %p189 = scmp.ne.s32.totalorder %s172, %s188
      %p190 = scmp.eq.s32.totalorder %s28, 0
      %p191 = por %p189, %p190
      %p192 = scmp.le.s32.totalorder 1, %s22
      %p193 = scmp.lt.s32.totalorder %s22, 3
      %p194 = pnand %p192, %p193
      %p195 = pneg %p194
      // Predicated region
      $region9: #{tpu_custom_call.1} parent=5 // pred_check
        _
      $region10: #{tpu_custom_call.1} parent=5 // pred_check_branch
        %197 = sbr.rel (%p194) target = $region12
      $region11: #{tpu_custom_call.1} parent=5 // pred_region
        %s198 = ssub.s32 %s22, 1
        // Predicated region
        $region13: #{tpu_custom_call.1} parent=11 // pred_check
          %p199 = pneg %p95
        $region14: #{tpu_custom_call.1} parent=11 // pred_check_branch
          %201 = sbr.rel (%p199) target = $region16
        $region15: #{tpu_custom_call.1} parent=11 // pred_region
          %203 = vsyncadd [#allocation6], 0
          %s204 = sshll.u32 %s2, 4
          %s205 = int_to_ptr.hbm [resolvable:$true] %s204
          %s206 = sshll.u32 [#allocation7], 4
          %s207 = int_to_ptr.vmem [resolvable:$true] %s206
          %212 = dma.hbm_to_vmem [thread:$0]  %s205, 2048, %s207, [#allocation6], 128, 128, 8
        $region16: #{tpu_custom_call.1} parent=11 // pred_fallthru
          _
        // Predicated region
        $region17: #{tpu_custom_call.1} parent=11 // pred_check
          %p213 = pneg %p116
        $region18: #{tpu_custom_call.1} parent=11 // pred_check_branch
          %215 = sbr.rel (%p213) target = $region20
        $region19: #{tpu_custom_call.1} parent=11 // pred_region
          _
        $region20: #{tpu_custom_call.1} parent=11 // pred_fallthru
          _
        // Predicated region
        $region21: #{tpu_custom_call.1} parent=11 // pred_check
          %p216 = pneg %p137
        $region22: #{tpu_custom_call.1} parent=11 // pred_check_branch
          %218 = sbr.rel (%p216) target = $region24
        $region23: #{tpu_custom_call.1} parent=11 // pred_region
          %220 = vsyncadd [#allocation9], 0
          %s221 = sshll.u32 %s4, 4
          %s222 = int_to_ptr.hbm [resolvable:$true] %s221
          %s223 = sshll.u32 [#allocation8], 4
          %s224 = int_to_ptr.vmem [resolvable:$true] %s223
          %229 = dma.hbm_to_vmem [thread:$0]  %s222, 2048, %s224, [#allocation9], 128, 128, 8
        $region24: #{tpu_custom_call.1} parent=11 // pred_fallthru
          _
        // Predicated region
        $region25: #{tpu_custom_call.1} parent=11 // pred_check
          %p230 = pneg %p158
        $region26: #{tpu_custom_call.1} parent=11 // pred_check_branch
          %232 = sbr.rel (%p230) target = $region28
        $region27: #{tpu_custom_call.1} parent=11 // pred_region
          _
        $region28: #{tpu_custom_call.1} parent=11 // pred_fallthru
          _
      $region12: #{tpu_custom_call.1} parent=5 // pred_fallthru
        _
      %p233 = scmp.lt.s32.totalorder %s22, 2
      // Predicated region
      $region29: #{tpu_custom_call.1} parent=5 // pred_check
        %p234 = pneg %p233
      $region30: #{tpu_custom_call.1} parent=5 // pred_check_branch
        %236 = sbr.rel (%p234) target = $region32
      $region31: #{tpu_custom_call.1} parent=5 // pred_region
        // Predicated region
        $region33: #{tpu_custom_call.1} parent=31 // pred_check
          %p237 = pneg %p42
        $region34: #{tpu_custom_call.1} parent=31 // pred_check_branch
          %239 = sbr.rel (%p237) target = $region36
        $region35: #{tpu_custom_call.1} parent=31 // pred_region
          %s240 = sand.u32 %s32, 1
          %s241 = scalar_lea.sflag [#allocation3], %s240
          %s242 = sand.u32 %s32, 1
          %s243 = smul.addr %s242, 8
          %s244 = scalar_lea.vmem [#allocation2], %s243
          %246 = vsyncadd %s241, 0
          %s247 = smul.addr %s22, 8
          %s248 = scalar_lea.hbm %s0, %s247
          %s250 = sshll.u32 %s248, 4
          %s251 = int_to_ptr.hbm [resolvable:$true] %s250
          %s252 = sshll.u32 %s244, 4
          %s253 = int_to_ptr.vmem [resolvable:$true] %s252
          %255 = dma.hbm_to_vmem [thread:$0]  %s251, 128, %s253, %s241
        $region36: #{tpu_custom_call.1} parent=31 // pred_fallthru
          _
        // Predicated region
        $region37: #{tpu_custom_call.1} parent=31 // pred_check
          %p256 = pneg %p68
        $region38: #{tpu_custom_call.1} parent=31 // pred_check_branch
          %258 = sbr.rel (%p256) target = $region40
        $region39: #{tpu_custom_call.1} parent=31 // pred_region
          %s259 = sand.u32 %s22, 1
          %s260 = scalar_lea.sflag [#allocation6], %s259
          %s261 = sand.u32 %s58, 1
          %s262 = smul.addr %s261, 16
          %s263 = scalar_lea.vmem [#allocation5], %s262
          %265 = vsyncadd %s260, 0
          %s266 = smul.addr %s22, 2
          %s267 = smul.addr %s266, 8
          %s268 = scalar_lea.hbm %s1, %s267
          %s269 = sshll.u32 %s268, 4
          %s270 = int_to_ptr.hbm [resolvable:$true] %s269
          %s271 = sshll.u32 %s263, 4
          %s272 = int_to_ptr.vmem [resolvable:$true] %s271
          %277 = dma.hbm_to_vmem [thread:$0]  %s270, 256, %s272, %s260, 128, 128, 8
        $region40: #{tpu_custom_call.1} parent=31 // pred_fallthru
          _
      $region32: #{tpu_custom_call.1} parent=5 // pred_fallthru
        _
      %p278 = scmp.le.s32.totalorder 1, %s22
      %p279 = scmp.lt.s32.totalorder %s22, 3
      %p280 = pnand %p278, %p279
      %p281 = pneg %p280
      // Predicated region
      $region41: #{tpu_custom_call.1} parent=5 // pred_check
        _
      $region42: #{tpu_custom_call.1} parent=5 // pred_check_branch
        %283 = sbr.rel (%p280) target = $region44
      $region43: #{tpu_custom_call.1} parent=5 // pred_region
        %s284 = ssub.s32 %s22, 1
        %s285 = sand.u32 %s35, 1
        %s286 = scalar_lea.sflag [#allocation3], %s285
        %s287 = sand.u32 %s35, 1
        %s288 = smul.addr %s287, 8
        %s289 = scalar_lea.vmem [#allocation2], %s288
        // Predicated region
        $region45: #{tpu_custom_call.1} parent=43 // pred_check
          %p290 = pneg %p48
        $region46: #{tpu_custom_call.1} parent=43 // pred_check_branch
          %292 = sbr.rel (%p290) target = $region48
        $region47: #{tpu_custom_call.1} parent=43 // pred_region
          %294 = dma.done %s286, 128
        $region48: #{tpu_custom_call.1} parent=43 // pred_fallthru
          _
        %s295 = sand.u32 %s27, 1
        %s296 = scalar_lea.sflag [#allocation6], %s295
        %s297 = sand.u32 %s61, 1
        %s298 = smul.addr %s297, 16
        %s299 = scalar_lea.vmem [#allocation5], %s298
        // Predicated region
        $region49: #{tpu_custom_call.1} parent=43 // pred_check
          %p300 = pneg %p74
        $region50: #{tpu_custom_call.1} parent=43 // pred_check_branch
          %302 = sbr.rel (%p300) target = $region52
        $region51: #{tpu_custom_call.1} parent=43 // pred_region
          %304 = dma.done %s296, 256
        $region52: #{tpu_custom_call.1} parent=43 // pred_fallthru
          _
        // Predicated region
        $region53: #{tpu_custom_call.1} parent=43 // pred_check
          %p305 = pneg %p95
        $region54: #{tpu_custom_call.1} parent=43 // pred_check_branch
          %307 = sbr.rel (%p305) target = $region56
        $region55: #{tpu_custom_call.1} parent=43 // pred_region
          %309 = dma.done [#allocation6], 2048
        $region56: #{tpu_custom_call.1} parent=43 // pred_fallthru
          _
        // Predicated region
        $region57: #{tpu_custom_call.1} parent=43 // pred_check
          %p310 = pneg %p137
        $region58: #{tpu_custom_call.1} parent=43 // pred_check_branch
          %312 = sbr.rel (%p310) target = $region60
        $region59: #{tpu_custom_call.1} parent=43 // pred_region
          %314 = dma.done [#allocation9], 2048
        $region60: #{tpu_custom_call.1} parent=43 // pred_fallthru
          _
        %s315 = sand.u32 %s35, 1
        %s316 = scalar_lea.sflag [#allocation3], %s315
        %s317 = sand.u32 %s35, 1
        %s318 = smul.addr %s317, 8
        %s319 = scalar_lea.vmem [#allocation2], %s318
        %p320 = pneg %p48
        %p321 = pneg %p45
        %s322 = sand.u32 %s27, 1
        %s323 = scalar_lea.sflag [#allocation6], %s322
        %s324 = sand.u32 %s61, 1
        %s325 = smul.addr %s324, 16
        %s326 = scalar_lea.vmem [#allocation5], %s325
        %p327 = pneg %p74
        %p328 = pneg %p71
        %p329 = pneg %p95
        %p330 = pneg %p92
        %p331 = pneg %p116
        %p332 = pneg %p113
        %p333 = pneg %p137
        %p334 = pneg %p134
        %p335 = pneg %p158
        %p336 = pneg %p155
        %p337 = pneg %p184
        %p338 = pneg %p181
        %s339 = sand.u32 %s171, 1
        %s340 = scalar_lea.sflag [#allocation4], %s339
        %s341 = sand.u32 %s171, 1
        %s342 = smul.addr %s341, 8
        %s343 = scalar_lea.vmem [#allocation10], %s342
        %v344 = vld [vmem:[%s289] sm:$0xff]
        %v345 = vld [vmem:[%s299] sm:$0xff]
        %v346 = vld [vmem:[%s299 + $0x8] sm:$0xff]
        %v347 = vld [vmem:[#allocation7] sm:$0xff]
        %v348 = vld [vmem:[#allocation7 + $0x8] sm:$0xff]
        %v349 = vld [vmem:[#allocation7 + $0x10] sm:$0xff]
        %v350 = vld [vmem:[#allocation7 + $0x18] sm:$0xff]
        %v351 = vld [vmem:[#allocation7 + $0x20] sm:$0xff]
        %v352 = vld [vmem:[#allocation7 + $0x28] sm:$0xff]
        %v353 = vld [vmem:[#allocation7 + $0x30] sm:$0xff]
        %v354 = vld [vmem:[#allocation7 + $0x38] sm:$0xff]
        %v355 = vld [vmem:[#allocation7 + $0x40] sm:$0xff]
        %v356 = vld [vmem:[#allocation7 + $0x48] sm:$0xff]
        %v357 = vld [vmem:[#allocation7 + $0x50] sm:$0xff]
        %v358 = vld [vmem:[#allocation7 + $0x58] sm:$0xff]
        %v359 = vld [vmem:[#allocation7 + $0x60] sm:$0xff]
        %v360 = vld [vmem:[#allocation7 + $0x68] sm:$0xff]
        %v361 = vld [vmem:[#allocation7 + $0x70] sm:$0xff]
        %v362 = vld [vmem:[#allocation7 + $0x78] sm:$0xff]
        %v363 = vld [vmem:[#allocation8] sm:$0xff]
        %v364 = vld [vmem:[#allocation8 + $0x8] sm:$0xff]
        %v365 = vld [vmem:[#allocation8 + $0x10] sm:$0xff]
        %v366 = vld [vmem:[#allocation8 + $0x18] sm:$0xff]
        %v367 = vld [vmem:[#allocation8 + $0x20] sm:$0xff]
        %v368 = vld [vmem:[#allocation8 + $0x28] sm:$0xff]
        %v369 = vld [vmem:[#allocation8 + $0x30] sm:$0xff]
        %v370 = vld [vmem:[#allocation8 + $0x38] sm:$0xff]
        %v371 = vld [vmem:[#allocation8 + $0x40] sm:$0xff]
        %v372 = vld [vmem:[#allocation8 + $0x48] sm:$0xff]
        %v373 = vld [vmem:[#allocation8 + $0x50] sm:$0xff]
        %v374 = vld [vmem:[#allocation8 + $0x58] sm:$0xff]
        %v375 = vld [vmem:[#allocation8 + $0x60] sm:$0xff]
        %v376 = vld [vmem:[#allocation8 + $0x68] sm:$0xff]
        %v377 = vld [vmem:[#allocation8 + $0x70] sm:$0xff]
        %v378 = vld [vmem:[#allocation8 + $0x78] sm:$0xff]
        %v379 = vld [vmem:[%s3] sm:$0x1]
        %v380 = vld [vmem:[%s5] sm:$0x1]
        %v382 = vperm.slane %v379, 0
        %384 = vmatpush.msra.mxu0 %v362
        %385 = vmatpush.msra.mxu0 %v361
        %386 = vmatpush.msra.mxu0 %v360
        %387 = vmatpush.msra.mxu0 %v359
        %388 = vmatpush.msra.mxu0 %v358
        %389 = vmatpush.msra.mxu0 %v357
        %390 = vmatpush.msra.mxu0 %v356
        %391 = vmatpush.msra.mxu0 %v355
        %392 = vmatpush.msra.mxu0 %v354
        %393 = vmatpush.msra.mxu0 %v353
        %394 = vmatpush.msra.mxu0 %v352
        %395 = vmatpush.msra.mxu0 %v351
        %396 = vmatpush.msra.mxu0 %v350
        %397 = vmatpush.msra.mxu0 %v349
        %398 = vmatpush.msra.mxu0 %v348
        %399 = vmatpush.msra.mxu0 %v347
        %400 = vmatmul.f32.gmra.mxu0 %v344
        %v401 = vpop.f32.mrf.mxu0
        %v402 = vadd.f32 %v382, %v401
        %403 = vdwg.mxu0
        %v405 = vperm.slane %v380, 0
        %407 = vmatpush.msra.mxu0 %v378
        %408 = vmatpush.msra.mxu0 %v377
        %409 = vmatpush.msra.mxu0 %v376
        %410 = vmatpush.msra.mxu0 %v375
        %411 = vmatpush.msra.mxu0 %v374
        %412 = vmatpush.msra.mxu0 %v373
        %413 = vmatpush.msra.mxu0 %v372
        %414 = vmatpush.msra.mxu0 %v371
        %415 = vmatpush.msra.mxu0 %v370
        %416 = vmatpush.msra.mxu0 %v369
        %417 = vmatpush.msra.mxu0 %v368
        %418 = vmatpush.msra.mxu0 %v367
        %419 = vmatpush.msra.mxu0 %v366
        %420 = vmatpush.msra.mxu0 %v365
        %421 = vmatpush.msra.mxu0 %v364
        %422 = vmatpush.msra.mxu0 %v363
        %423 = vmatmul.f32.gmra.mxu0 %v345
        %v424 = vpop.f32.mrf.mxu0
        %v425 = vadd.f32 %v405, %v424
        %426 = vmatmul.f32.gmra.mxu0 %v346
        %v427 = vpop.f32.mrf.mxu0
        %v428 = vadd.f32 %v405, %v427
        %429 = vdwg.mxu0
        %430 = vmatpush.xpose.msra.mxu0 0.0
        %431 = vmatpush.xpose.msra.mxu0 0.0
        %432 = vmatpush.xpose.msra.mxu0 0.0
        %433 = vmatpush.xpose.msra.mxu0 0.0
        %434 = vmatpush.xpose.msra.mxu0 0.0
        %435 = vmatpush.xpose.msra.mxu0 0.0
        %436 = vmatpush.xpose.msra.mxu0 0.0
        %437 = vmatpush.xpose.msra.mxu0 0.0
        %438 = vmatpush.xpose.msra.mxu0 0.0
        %439 = vmatpush.xpose.msra.mxu0 0.0
        %440 = vmatpush.xpose.msra.mxu0 0.0
        %441 = vmatpush.xpose.msra.mxu0 0.0
        %442 = vmatpush.xpose.msra.mxu0 0.0
        %443 = vmatpush.xpose.msra.mxu0 0.0
        %444 = vmatpush.xpose.msra.mxu0 %v428
        %445 = vmatpush.xpose.msra.mxu0 %v425
        %446 = vmatmul.f32.gmra.mxu0 %v402
        %v447 = vpop.f32.mrf.mxu0
        %v448 = vadd.f32 0.0, %v447
        %449 = vdwg.mxu0
        %vm450 = vcmp.ge.f32.partialorder %v448, 0.0
        %v451 = vmul.f32 %v448, 0.1
        %v452 = vsel %vm450, %v448, %v451
        %v453 = vmul.f32 %v452, %v452
        %vm454 = vcmask 130048
        %v455 = vsel %vm454, %v453, 0.0
        %v456 = vrot.slane %v455, 4
        %v457 = vadd.f32 %v455, %v456
        %v458 = vrot.slane %v457, 2
        %v459 = vadd.f32 %v457, %v458
        %v460 = vrot.slane %v459, 1
        %v461 = vadd.f32 %v459, %v460
        %v462 = vadd.f32 %v461, 1e-16
        %v463 = vrsqrt.pop %v462
        %v464 = vmul.f32 %v463, %v462
        %v465 = vmul.f32 %v464, %v463
        %v466 = vmul.f32 0.5, %v465
        %v467 = vsub.f32 1.5, %v466
        %v468 = vmul.f32 %v463, %v467
        %vm469 = vweird.f32 %v462
        %vm470 = vweird.f32 %v463
        %vm471 = vmor %vm469, %vm470
        %v472 = vsel %vm471, %v463, %v468
        %v473 = vmul.f32 %v452, %v472
        %v474 = vmul.f32 %v473, 9.0
        %v475 = vsel %vm454, %v474, -inf
        %476 = vmax.xlane.f32.xlu0 %v475
        %v477 = vpop.xlane.xlu0 %476
        %v478 = vsub.f32 %v474, %v477
        %v479 = vmul.f32 %v478, 1.442695
        %v480 = vpow.pop %v479
        %v481 = vsel %vm454, %v480, 0.0
        %482 = vadd.xlane.f32.xlu0 %v481
        %v483 = vpop.xlane.xlu0 %482
        %v484 = vrcp.pop %v483
        %v485 = vmul.f32 %v480, %v484
        %v487 = vsel %vm454, %v485, 0
        %489 = vmatpush.msra.mxu0 0.0
        %490 = vmatpush.msra.mxu0 0.0
        %491 = vmatpush.msra.mxu0 0.0
        %492 = vmatpush.msra.mxu0 0.0
        %493 = vmatpush.msra.mxu0 0.0
        %494 = vmatpush.msra.mxu0 0.0
        %495 = vmatpush.msra.mxu0 0.0
        %496 = vmatpush.msra.mxu0 0.0
        %497 = vmatpush.msra.mxu0 0.0
        %498 = vmatpush.msra.mxu0 0.0
        %499 = vmatpush.msra.mxu0 0.0
        %500 = vmatpush.msra.mxu0 0.0
        %501 = vmatpush.msra.mxu0 0.0
        %502 = vmatpush.msra.mxu0 0.0
        %503 = vmatpush.msra.mxu0 %v346
        %504 = vmatpush.msra.mxu0 %v345
        %505 = vmatmul.f32.gmra.mxu0 %v487
        %v506 = vpop.f32.mrf.mxu0
        %v507 = vadd.f32 0.0, %v506
        %508 = vdwg.mxu0
        %v509 = vmul.f32 %v507, %v507
        %510 = vadd.xlane.f32.xlu0 %v509
        %v511 = vpop.xlane.xlu0 %510
        %v512 = vadd.f32 %v511, 1e-16
        %v513 = vrsqrt.pop %v512
        %v514 = vmul.f32 %v513, %v512
        %v515 = vmul.f32 %v514, %v513
        %v516 = vmul.f32 0.5, %v515
        %v517 = vsub.f32 1.5, %v516
        %v518 = vmul.f32 %v513, %v517
        %vm519 = vweird.f32 %v512
        %vm520 = vweird.f32 %v513
        %vm521 = vmor %vm519, %vm520
        %v522 = vsel %vm521, %v513, %v518
        %v523 = vmul.f32 %v507, %v522
        %524 = vst [vmem:[%s343] sm:$0xff] %v523
        %s525 = sand.u32 %s171, 1
        %s526 = scalar_lea.sflag [#allocation4], %s525
        %s527 = sand.u32 %s171, 1
        %s528 = smul.addr %s527, 8
        %s529 = scalar_lea.vmem [#allocation10], %s528
        // Predicated region
        $region61: #{tpu_custom_call.1} parent=43 // pred_check
          %p530 = pneg %p181
        $region62: #{tpu_custom_call.1} parent=43 // pred_check_branch
          %532 = sbr.rel (%p530) target = $region64
        $region63: #{tpu_custom_call.1} parent=43 // pred_region
          %534 = vsyncadd %s526, 0
          %s535 = smul.addr %s27, 8
          %s536 = scalar_lea.hbm %s6, %s535
          %s538 = sshll.u32 %s529, 4
          %s539 = int_to_ptr.vmem [resolvable:$true] %s538
          %s540 = sshll.u32 %s536, 4
          %s541 = int_to_ptr.hbm [resolvable:$true] %s540
          %543 = dma.vmem_to_hbm [thread:$0]  %s539, 128, %s541, %s526
        $region64: #{tpu_custom_call.1} parent=43 // pred_fallthru
          _
      $region44: #{tpu_custom_call.1} parent=5 // pred_fallthru
        _
      %p544 = scmp.le.s32.totalorder 2, %s22
      // Predicated region
      $region65: #{tpu_custom_call.1} parent=5 // pred_check
        %p545 = pneg %p544
      $region66: #{tpu_custom_call.1} parent=5 // pred_check_branch
        %547 = sbr.rel (%p545) target = $region68
      $region67: #{tpu_custom_call.1} parent=5 // pred_region
        %s548 = ssub.s32 %s22, 2
        // Predicated region
        $region69: #{tpu_custom_call.1} parent=67 // pred_check
          %p549 = pneg %p187
        $region70: #{tpu_custom_call.1} parent=67 // pred_check_branch
          %551 = sbr.rel (%p549) target = $region72
        $region71: #{tpu_custom_call.1} parent=67 // pred_region
          %s552 = sand.u32 %s172, 1
          %s553 = scalar_lea.sflag [#allocation4], %s552
          %s554 = sand.u32 %s172, 1
          %s555 = smul.addr %s554, 8
          %s556 = scalar_lea.vmem [#allocation10], %s555
          %558 = dma.done %s553, 128
        $region72: #{tpu_custom_call.1} parent=67 // pred_fallthru
          _
      $region68: #{tpu_custom_call.1} parent=5 // pred_fallthru
        _
    $region6: #{tpu_custom_call.1} parent=1 // loop_footer
      %s26 = sadd.s32 1, %s22
    $region7: #{tpu_custom_call.1} parent=1 // loop_footer_branch
      %21 = sbr.rel target = $region3
    $region8: #{tpu_custom_call.1} parent=1 // loop_exit
      _
    %559 = vsyncpa [#allocation3], 1
    %s560 = scalar_lea.sflag [#allocation3], 1
    %561 = vsyncpa %s560, 1
    %562 = vsyncpa [#allocation6], 1
    %s563 = scalar_lea.sflag [#allocation6], 1
    %564 = vsyncpa %s563, 1
    %565 = vsyncpa [#allocation9], 1
    %566 = vsyncpa [#allocation4], 1
    %s567 = scalar_lea.sflag [#allocation4], 1
    %568 = vsyncpa %s567, 1

</llo_original>
